<compile_context>
chip_gen: v7x
topology: tpu7x:2x2x1
jax: 0.10.0
libtpu: 0.0.40
codegen_flags: <defaults>
</compile_context>

<pallas_src>
import functools

import jax
import jax.numpy as jnp
from jax import lax
from jax.experimental import pallas as pl
from jax.experimental.pallas import tpu as pltpu

BN_EPS = 1e-5
LANE = 128
ROW_OFF = 8  # real rows start at this (8-aligned) sublane offset in scratch


def _decoder_block_kernel(x_ref, t1_ref, b1_ref, t2_ref, b2_ref, out_ref,
                          pad_ref, *, NB, H, L, Lp):
    """Fused DecoderBlock (scale=1, eval-mode BN) for NB images.

    x_ref   : (NB, H, L)   f32   (w,c)-packed rows, L = W*C (unpadded)
    t1_ref  : (3, Lp, Lp)  bf16  conv1 block-Toeplitz taps (per dy), BN1 folded
    b1_ref  : (1, Lp)      f32   BN1 folded bias, tiled over w
    t2_ref  : (3, Lp, Lp)  bf16  conv2 taps, BN2 folded
    b2_ref  : (1, Lp)      f32   BN2 folded bias
    out_ref : (NB, H, L)   f32
    pad_ref : (NB, Hpad, Lp) bf16 VMEM scratch; rows ROW_OFF..ROW_OFF+H-1 hold
              data, rows ROW_OFF-1 and ROW_OFF+H are the zero halo.
    """
    off = ROW_OFF

    # Zero the scratch once. Only the halo rows (and lane padding) must stay
    # zero; the interior is fully overwritten every step and the halo ring is
    # never written elsewhere, so it stays zero across grid steps.
    @pl.when(pl.program_id(0) == 0)
    def _():
        pad_ref[...] = jnp.zeros_like(pad_ref)

    x = x_ref[...]                                   # (NB, H, L) f32 (residual)
    xb = x.astype(jnp.bfloat16)
    if L == Lp:
        pad_ref[:, off:off + H, :] = xb
    else:
        pad_ref[:, off:off + H, :L] = xb

    def conv3x3_bn(t_ref, b_ref):
        # One (NB*H, Lp) @ (Lp, Lp) MXU matmul per dy tap; dx shifts and the
        # channel mix are baked into the block-Toeplitz weight, so there are
        # no im2col copies and no channel padding anywhere.
        acc = None
        for dy in range(3):
            rows = pad_ref[:, off - 1 + dy: off - 1 + dy + H, :]  # (NB,H,Lp) bf16
            part = jnp.dot(rows.reshape(NB * H, Lp), t_ref[dy],
                           preferred_element_type=jnp.float32)
            acc = part if acc is None else acc + part
        return acc + b_ref[0]                        # (NB*H, Lp) f32

    # Stage 1: conv1 + bn1 + ReLU. Activation reuses the same VMEM scratch
    # (input halo buffer is dead after conv1; residual uses the f32 x above).
    h1 = jnp.maximum(conv3x3_bn(t1_ref, b1_ref), 0.0)
    pad_ref[:, off:off + H, :] = h1.reshape(NB, H, Lp).astype(jnp.bfloat16)

    # Stage 2: conv2 + bn2 + residual (f32) + ReLU, one lane-dense store.
    h2 = conv3x3_bn(t2_ref, b2_ref)
    if L != Lp:
        h2 = h2[:, :L]
    out_ref[...] = jnp.maximum(h2.reshape(NB, H, L) + x, 0.0).astype(out_ref.dtype)


def _fold_bn_toeplitz(w_oihw, gamma, beta, mean, var, W, Lp):
    """PyTorch (Cout,Cin,3,3) conv weight + eval-mode BN -> block-Toeplitz taps.

    Returns:
      T    : (3, Lp, Lp) bf16. T[dy, w_in*Cin+cin, w_out*Cout+cout] =
             w[cout,cin,dy,dx]*scale[cout] where w_in == w_out + dx - 1
             (zero outside the valid dx range / in the lane padding).
      bias : (1, Lp) f32 folded BN bias tiled over w (zero in padded lanes).
    """
    cout, cin = w_oihw.shape[0], w_oihw.shape[1]
    scale = gamma / jnp.sqrt(var + BN_EPS)                    # (cout,)
    bias = beta - mean * scale                                # (cout,)
    wf = jnp.transpose(w_oihw, (2, 3, 1, 0)) * scale          # (3,3,Cin,Cout)

    taps = []
    for dy in range(3):
        t = jnp.zeros((W * cin, W * cout), jnp.float32)
        for dx in range(3):
            # shift-by-(dx-1) block diagonal: selects input column w_out+dx-1
            shift = jnp.eye(W, W, k=1 - dx, dtype=jnp.float32)
            t = t + jnp.kron(shift, wf[dy, dx])
        taps.append(t)
    T = jnp.stack(taps)                                       # (3, W*Cin, W*Cout)
    T = jnp.pad(T, ((0, 0), (0, Lp - W * cin), (0, Lp - W * cout)))
    T = T.astype(jnp.bfloat16)

    bias_packed = jnp.tile(bias, W)                           # (W*cout,)
    bias_packed = jnp.pad(bias_packed, (0, Lp - W * cout))
    return T, bias_packed.astype(jnp.float32)[None, :]


def decoder_block_forward(x_nchw, params, scale=1, upsample=None):
    """Matches DecoderBlock.forward (eval-mode BN). NCHW in / NCHW out."""
    if scale != 1 or upsample is not None:
        # TODO(synk): scale != 1 / custom upsample path not implemented.
        raise NotImplementedError("only scale=1, upsample=None is supported")

    N, C, H, W = x_nchw.shape
    planes = params["w2"].shape[0]
    inplanes = params["w1"].shape[0]
    assert inplanes == C
    assert planes == C, "residual add requires planes == inplanes when upsample is None"

    L = W * C                                                  # (w,c) lane packing
    Lp = ((L + LANE - 1) // LANE) * LANE
    # TODO(synk): larger W*C needs the general row-tiled im2col path.
    assert Lp <= 1024, "block-Toeplitz path only supports small W*C"

    # NCHW -> NHWC -> (N, H, W*C) packed rows; unpadded HBM traffic.
    x = jnp.transpose(x_nchw, (0, 2, 3, 1)).reshape(N, H, L).astype(jnp.float32)

    t1, b1 = _fold_bn_toeplitz(params["w1"], params["g1"], params["b1"],
                               params["m1"], params["v1"], W, Lp)
    t2, b2 = _fold_bn_toeplitz(params["w2"], params["g2"], params["b2"],
                               params["m2"], params["v2"], W, Lp)

    NB = N                        # whole batch folded into the matmul M dim
    Hpad = ((ROW_OFF + H + 1 + 7) // 8) * 8

    kernel = functools.partial(_decoder_block_kernel, NB=NB, H=H, L=L, Lp=Lp)

    out = pl.pallas_call(
        kernel,
        out_shape=jax.ShapeDtypeStruct((N, H, L), jnp.float32),
        grid_spec=pltpu.PrefetchScalarGridSpec(
            num_scalar_prefetch=0,
            grid=(N // NB,),
            in_specs=[
                pl.BlockSpec((NB, H, L), lambda i: (i, 0, 0)),
                pl.BlockSpec((3, Lp, Lp), lambda i: (0, 0, 0)),
                pl.BlockSpec((1, Lp), lambda i: (0, 0)),
                pl.BlockSpec((3, Lp, Lp), lambda i: (0, 0, 0)),
                pl.BlockSpec((1, Lp), lambda i: (0, 0)),
            ],
            out_specs=pl.BlockSpec((NB, H, L), lambda i: (i, 0, 0)),
            scratch_shapes=[
                pltpu.VMEM((NB, Hpad, Lp), jnp.bfloat16),  # halo slab (reused)
            ],
        ),
        compiler_params=pltpu.CompilerParams(
            dimension_semantics=("parallel",),
        ),
    )(x, t1, b1, t2, b2)

    out = out.reshape(N, H, W, C)
    return jnp.transpose(out, (0, 3, 1, 2))                    # NHWC -> NCHW


# ----------------------------- reference (pure JAX, f32) ---------------------
def _ref_conv3x3(x_nhwc, w_oihw):
    w_hwio = jnp.transpose(w_oihw, (2, 3, 1, 0))
    return lax.conv_general_dilated(
        x_nhwc, w_hwio, window_strides=(1, 1), padding="SAME",
        dimension_numbers=("NHWC", "HWIO", "NHWC"))


def _ref_bn(x, g, b, m, v):
    return (x - m) / jnp.sqrt(v + BN_EPS) * g + b


def decoder_block_reference(x_nchw, params):
    x = jnp.transpose(x_nchw, (0, 2, 3, 1)).astype(jnp.float32)
    identity = x
    out = jax.nn.relu(_ref_bn(_ref_conv3x3(x, params["w1"]),
                              params["g1"], params["b1"],
                              params["m1"], params["v1"]))
    out = _ref_bn(_ref_conv3x3(out, params["w2"]),
                  params["g2"], params["b2"], params["m2"], params["v2"])
    out = jax.nn.relu(out + identity)
    return jnp.transpose(out, (0, 3, 1, 2))


# --------------------------------- demo --------------------------------------
if __name__ == "__main__":
    # Shapes consistent with DecoderBlock(inplanes=8, planes=8, scale=1).
    N, C, H, W = 2, 8, 16, 16
    inplanes = planes = C

    key = jax.random.PRNGKey(0)
    ks = jax.random.split(key, 11)
    params = {
        "w1": 0.1 * jax.random.normal(ks[0], (inplanes, inplanes, 3, 3), jnp.float32),
        "g1": 1.0 + 0.1 * jax.random.normal(ks[1], (inplanes,), jnp.float32),
        "b1": 0.05 * jax.random.normal(ks[2], (inplanes,), jnp.float32),
        "m1": 0.05 * jax.random.normal(ks[3], (inplanes,), jnp.float32),
        "v1": 1.0 + 0.1 * jax.random.uniform(ks[4], (inplanes,), jnp.float32),
        "w2": 0.1 * jax.random.normal(ks[5], (planes, inplanes, 3, 3), jnp.float32),
        "g2": 1.0 + 0.1 * jax.random.normal(ks[6], (planes,), jnp.float32),
        "b2": 0.05 * jax.random.normal(ks[7], (planes,), jnp.float32),
        "m2": 0.05 * jax.random.normal(ks[8], (planes,), jnp.float32),
        "v2": 1.0 + 0.1 * jax.random.uniform(ks[9], (planes,), jnp.float32),
    }
    x = jax.random.normal(ks[10], (N, C, H, W), jnp.float32)

    out = decoder_block_forward(x, params, scale=1, upsample=None)
    out = jax.block_until_ready(out)

    ref = jax.block_until_ready(decoder_block_reference(x, params))
    assert out.shape == (N, planes, H, W), out.shape
    # bf16 MXU operands vs. f32 reference -> tolerance loosened accordingly.
    max_err = float(jnp.max(jnp.abs(out - ref)))
    assert jnp.allclose(out, ref, rtol=5e-2, atol=5e-2), max_err

    print("KERNEL_OK")
</pallas_src>

<mosaic_0001>
module attributes {stable_mosaic.version = 11 : i64} {
  func.func @_decoder_block_kernel(%arg0: i32, %arg1: memref<2x16x128xf32, #tpu.memory_space<vmem>>, %arg2: memref<3x128x128xbf16, #tpu.memory_space<vmem>>, %arg3: memref<1x128xf32, #tpu.memory_space<vmem>>, %arg4: memref<3x128x128xbf16, #tpu.memory_space<vmem>>, %arg5: memref<1x128xf32, #tpu.memory_space<vmem>>, %arg6: memref<2x16x128xf32, #tpu.memory_space<vmem>>, %arg7: memref<2x32x128xbf16, #tpu.memory_space<vmem>>) attributes {dimension_semantics = [#tpu.dimension_semantics<parallel>], iteration_bounds = array<i64: 1>, scalar_prefetch = 0 : i64, scratch_operands = 1 : i64, tpu.core_type = #tpu.core_type<tc>, window_params = [{transform_indices = @transform_0, window_bounds = array<i64: 2, 16, 128>}, {pipeline_mode = #tpu.pipeline_mode<synchronous>, transform_indices = @transform_1, window_bounds = array<i64: 3, 128, 128>}, {pipeline_mode = #tpu.pipeline_mode<synchronous>, transform_indices = @transform_2, window_bounds = array<i64: 1, 128>}, {pipeline_mode = #tpu.pipeline_mode<synchronous>, transform_indices = @transform_3, window_bounds = array<i64: 3, 128, 128>}, {pipeline_mode = #tpu.pipeline_mode<synchronous>, transform_indices = @transform_4, window_bounds = array<i64: 1, 128>}, {transform_indices = @transform_5, window_bounds = array<i64: 2, 16, 128>}]} {
    %c0_i32 = arith.constant 0 : i32
    %0 = arith.cmpi eq, %arg0, %c0_i32 : i32
    %1 = arith.extui %0 : i1 to i32
    %c0_i32_0 = arith.constant 0 : i32
    %2 = arith.cmpi ne, %1, %c0_i32_0 : i32
    scf.if %2 {
      %cst_54 = arith.constant 0.000000e+00 : bf16
      %60 = vector.broadcast %cst_54 : bf16 to vector<2x32x128xbf16>
      %c0_55 = arith.constant 0 : index
      %c0_56 = arith.constant 0 : index
      %c0_57 = arith.constant 0 : index
      %61 = vector.load %arg7[%c0_55, %c0_56, %c0_57] : memref<2x32x128xbf16, #tpu.memory_space<vmem>>, vector<2x32x128xbf16>
      tpu.vector_store %arg7[%c0_55, %c0_56, %c0_57], %60 {strides = array<i32>} : memref<2x32x128xbf16, #tpu.memory_space<vmem>>, vector<2x32x128xbf16>,
    } else {
    }
    %c0 = arith.constant 0 : index
    %c0_1 = arith.constant 0 : index
    %c0_2 = arith.constant 0 : index
    %3 = vector.load %arg1[%c0, %c0_1, %c0_2] : memref<2x16x128xf32, #tpu.memory_space<vmem>>, vector<2x16x128xf32>
    %4 = arith.truncf %3 : vector<2x16x128xf32> to vector<2x16x128xbf16>
    %c0_3 = arith.constant 0 : index
    %c8 = arith.constant 8 : index
    %c0_4 = arith.constant 0 : index
    %5 = vector.load %arg7[%c0_3, %c8, %c0_4] : memref<2x32x128xbf16, #tpu.memory_space<vmem>>, vector<2x16x128xbf16>
    tpu.vector_store %arg7[%c0_3, %c8, %c0_4], %4 {strides = array<i32>} : memref<2x32x128xbf16, #tpu.memory_space<vmem>>, vector<2x16x128xbf16>,
    %c0_5 = arith.constant 0 : index
    %c7 = arith.constant 7 : index
    %c0_6 = arith.constant 0 : index
    %6 = vector.load %arg7[%c0_5, %c7, %c0_6] : memref<2x32x128xbf16, #tpu.memory_space<vmem>>, vector<2x16x128xbf16>
    %7 = vector.shape_cast %6 : vector<2x16x128xbf16> to vector<32x128xbf16>
    %c0_7 = arith.constant 0 : index
    %c0_8 = arith.constant 0 : index
    %c0_9 = arith.constant 0 : index
    %8 = vector.load %arg2[%c0_7, %c0_8, %c0_9] : memref<3x128x128xbf16, #tpu.memory_space<vmem>>, vector<1x128x128xbf16>
    %9 = vector.shape_cast %8 : vector<1x128x128xbf16> to vector<128x128xbf16>
    %cst = arith.constant dense<0.000000e+00> : vector<32x128xf32>
    %10 = tpu.matmul %7, %9, %cst {dimension_numbers = #tpu.dot_dimension_numbers<[1], [0], [0], [1], [0, 0, 1, 1], [], []>} : vector<32x128xbf16>, vector<128x128xbf16>, vector<32x128xf32> -> vector<32x128xf32>
    %c0_10 = arith.constant 0 : index
    %c8_11 = arith.constant 8 : index
    %c0_12 = arith.constant 0 : index
    %11 = vector.load %arg7[%c0_10, %c8_11, %c0_12] : memref<2x32x128xbf16, #tpu.memory_space<vmem>>, vector<2x16x128xbf16>
    %12 = vector.shape_cast %11 : vector<2x16x128xbf16> to vector<32x128xbf16>
    %c1 = arith.constant 1 : index
    %c0_13 = arith.constant 0 : index
    %c0_14 = arith.constant 0 : index
    %13 = vector.load %arg2[%c1, %c0_13, %c0_14] : memref<3x128x128xbf16, #tpu.memory_space<vmem>>, vector<1x128x128xbf16>
    %14 = vector.shape_cast %13 : vector<1x128x128xbf16> to vector<128x128xbf16>
    %cst_15 = arith.constant dense<0.000000e+00> : vector<32x128xf32>
    %15 = tpu.matmul %12, %14, %cst_15 {dimension_numbers = #tpu.dot_dimension_numbers<[1], [0], [0], [1], [0, 0, 1, 1], [], []>} : vector<32x128xbf16>, vector<128x128xbf16>, vector<32x128xf32> -> vector<32x128xf32>
    %16 = arith.addf %10, %15 : vector<32x128xf32>
    %c0_16 = arith.constant 0 : index
    %c9 = arith.constant 9 : index
    %c0_17 = arith.constant 0 : index
    %17 = vector.load %arg7[%c0_16, %c9, %c0_17] : memref<2x32x128xbf16, #tpu.memory_space<vmem>>, vector<2x16x128xbf16>
    %18 = vector.shape_cast %17 : vector<2x16x128xbf16> to vector<32x128xbf16>
    %c2 = arith.constant 2 : index
    %c0_18 = arith.constant 0 : index
    %c0_19 = arith.constant 0 : index
    %19 = vector.load %arg2[%c2, %c0_18, %c0_19] : memref<3x128x128xbf16, #tpu.memory_space<vmem>>, vector<1x128x128xbf16>
    %20 = vector.shape_cast %19 : vector<1x128x128xbf16> to vector<128x128xbf16>
    %cst_20 = arith.constant dense<0.000000e+00> : vector<32x128xf32>
    %21 = tpu.matmul %18, %20, %cst_20 {dimension_numbers = #tpu.dot_dimension_numbers<[1], [0], [0], [1], [0, 0, 1, 1], [], []>} : vector<32x128xbf16>, vector<128x128xbf16>, vector<32x128xf32> -> vector<32x128xf32>
    %22 = arith.addf %16, %21 : vector<32x128xf32>
    %c0_21 = arith.constant 0 : index
    %c0_22 = arith.constant 0 : index
    %23 = vector.load %arg3[%c0_21, %c0_22] : memref<1x128xf32, #tpu.memory_space<vmem>>, vector<1x128xf32>
    %24 = vector.shape_cast %23 : vector<1x128xf32> to vector<128xf32>
    %25 = vector.shape_cast %24 : vector<128xf32> to vector<1x128xf32>
    %26 = vector.broadcast %25 : vector<1x128xf32> to vector<32x128xf32>
    %27 = arith.addf %22, %26 : vector<32x128xf32>
    %cst_23 = arith.constant 0.000000e+00 : f32
    %28 = vector.broadcast %cst_23 : f32 to vector<32x128xf32>
    %29 = arith.maximumf %27, %28 : vector<32x128xf32>
    %30 = vector.shape_cast %29 : vector<32x128xf32> to vector<2x16x128xf32>
    %31 = arith.truncf %30 : vector<2x16x128xf32> to vector<2x16x128xbf16>
    %c0_24 = arith.constant 0 : index
    %c8_25 = arith.constant 8 : index
    %c0_26 = arith.constant 0 : index
    %32 = vector.load %arg7[%c0_24, %c8_25, %c0_26] : memref<2x32x128xbf16, #tpu.memory_space<vmem>>, vector<2x16x128xbf16>
    tpu.vector_store %arg7[%c0_24, %c8_25, %c0_26], %31 {strides = array<i32>} : memref<2x32x128xbf16, #tpu.memory_space<vmem>>, vector<2x16x128xbf16>,
    %c0_27 = arith.constant 0 : index
    %c7_28 = arith.constant 7 : index
    %c0_29 = arith.constant 0 : index
    %33 = vector.load %arg7[%c0_27, %c7_28, %c0_29] : memref<2x32x128xbf16, #tpu.memory_space<vmem>>, vector<2x16x128xbf16>
    %34 = vector.shape_cast %33 : vector<2x16x128xbf16> to vector<32x128xbf16>
    %c0_30 = arith.constant 0 : index
    %c0_31 = arith.constant 0 : index
    %c0_32 = arith.constant 0 : index
    %35 = vector.load %arg4[%c0_30, %c0_31, %c0_32] : memref<3x128x128xbf16, #tpu.memory_space<vmem>>, vector<1x128x128xbf16>
    %36 = vector.shape_cast %35 : vector<1x128x128xbf16> to vector<128x128xbf16>
    %cst_33 = arith.constant dense<0.000000e+00> : vector<32x128xf32>
    %37 = tpu.matmul %34, %36, %cst_33 {dimension_numbers = #tpu.dot_dimension_numbers<[1], [0], [0], [1], [0, 0, 1, 1], [], []>} : vector<32x128xbf16>, vector<128x128xbf16>, vector<32x128xf32> -> vector<32x128xf32>
    %c0_34 = arith.constant 0 : index
    %c8_35 = arith.constant 8 : index
    %c0_36 = arith.constant 0 : index
    %38 = vector.load %arg7[%c0_34, %c8_35, %c0_36] : memref<2x32x128xbf16, #tpu.memory_space<vmem>>, vector<2x16x128xbf16>
    %39 = vector.shape_cast %38 : vector<2x16x128xbf16> to vector<32x128xbf16>
    %c1_37 = arith.constant 1 : index
    %c0_38 = arith.constant 0 : index
    %c0_39 = arith.constant 0 : index
    %40 = vector.load %arg4[%c1_37, %c0_38, %c0_39] : memref<3x128x128xbf16, #tpu.memory_space<vmem>>, vector<1x128x128xbf16>
    %41 = vector.shape_cast %40 : vector<1x128x128xbf16> to vector<128x128xbf16>
    %cst_40 = arith.constant dense<0.000000e+00> : vector<32x128xf32>
    %42 = tpu.matmul %39, %41, %cst_40 {dimension_numbers = #tpu.dot_dimension_numbers<[1], [0], [0], [1], [0, 0, 1, 1], [], []>} : vector<32x128xbf16>, vector<128x128xbf16>, vector<32x128xf32> -> vector<32x128xf32>
    %43 = arith.addf %37, %42 : vector<32x128xf32>
    %c0_41 = arith.constant 0 : index
    %c9_42 = arith.constant 9 : index
    %c0_43 = arith.constant 0 : index
    %44 = vector.load %arg7[%c0_41, %c9_42, %c0_43] : memref<2x32x128xbf16, #tpu.memory_space<vmem>>, vector<2x16x128xbf16>
    %45 = vector.shape_cast %44 : vector<2x16x128xbf16> to vector<32x128xbf16>
    %c2_44 = arith.constant 2 : index
    %c0_45 = arith.constant 0 : index
    %c0_46 = arith.constant 0 : index
    %46 = vector.load %arg4[%c2_44, %c0_45, %c0_46] : memref<3x128x128xbf16, #tpu.memory_space<vmem>>, vector<1x128x128xbf16>
    %47 = vector.shape_cast %46 : vector<1x128x128xbf16> to vector<128x128xbf16>
    %cst_47 = arith.constant dense<0.000000e+00> : vector<32x128xf32>
    %48 = tpu.matmul %45, %47, %cst_47 {dimension_numbers = #tpu.dot_dimension_numbers<[1], [0], [0], [1], [0, 0, 1, 1], [], []>} : vector<32x128xbf16>, vector<128x128xbf16>, vector<32x128xf32> -> vector<32x128xf32>
    %49 = arith.addf %43, %48 : vector<32x128xf32>
    %c0_48 = arith.constant 0 : index
    %c0_49 = arith.constant 0 : index
    %50 = vector.load %arg5[%c0_48, %c0_49] : memref<1x128xf32, #tpu.memory_space<vmem>>, vector<1x128xf32>
    %51 = vector.shape_cast %50 : vector<1x128xf32> to vector<128xf32>
    %52 = vector.shape_cast %51 : vector<128xf32> to vector<1x128xf32>
    %53 = vector.broadcast %52 : vector<1x128xf32> to vector<32x128xf32>
    %54 = arith.addf %49, %53 : vector<32x128xf32>
    %55 = vector.shape_cast %54 : vector<32x128xf32> to vector<2x16x128xf32>
    %56 = arith.addf %55, %3 : vector<2x16x128xf32>
    %cst_50 = arith.constant 0.000000e+00 : f32
    %57 = vector.broadcast %cst_50 : f32 to vector<2x16x128xf32>
    %58 = arith.maximumf %56, %57 : vector<2x16x128xf32>
    %c0_51 = arith.constant 0 : index
    %c0_52 = arith.constant 0 : index
    %c0_53 = arith.constant 0 : index
    %59 = vector.load %arg6[%c0_51, %c0_52, %c0_53] : memref<2x16x128xf32, #tpu.memory_space<vmem>>, vector<2x16x128xf32>
    tpu.vector_store %arg6[%c0_51, %c0_52, %c0_53], %58 {strides = array<i32>} : memref<2x16x128xf32, #tpu.memory_space<vmem>>, vector<2x16x128xf32>,
    return
  }
  func.func @transform_0(%arg0: i32) -> (i32, i32, i32) {
    %c0_i32 = arith.constant 0 : i32
    %c0_i32_0 = arith.constant 0 : i32
    %c0_i32_1 = arith.constant 0 : i32
    return %arg0, %c0_i32, %c0_i32_0 : i32, i32, i32
  }
  func.func @transform_1(%arg0: i32) -> (i32, i32, i32) {
    %c0_i32 = arith.constant 0 : i32
    %c0_i32_0 = arith.constant 0 : i32
    %c0_i32_1 = arith.constant 0 : i32
    %c0_i32_2 = arith.constant 0 : i32
    return %c0_i32, %c0_i32_0, %c0_i32_1 : i32, i32, i32
  }
  func.func @transform_2(%arg0: i32) -> (i32, i32) {
    %c0_i32 = arith.constant 0 : i32
    %c0_i32_0 = arith.constant 0 : i32
    %c0_i32_1 = arith.constant 0 : i32
    return %c0_i32, %c0_i32_0 : i32, i32
  }
  func.func @transform_3(%arg0: i32) -> (i32, i32, i32) {
    %c0_i32 = arith.constant 0 : i32
    %c0_i32_0 = arith.constant 0 : i32
    %c0_i32_1 = arith.constant 0 : i32
    %c0_i32_2 = arith.constant 0 : i32
    return %c0_i32, %c0_i32_0, %c0_i32_1 : i32, i32, i32
  }
  func.func @transform_4(%arg0: i32) -> (i32, i32) {
    %c0_i32 = arith.constant 0 : i32
    %c0_i32_0 = arith.constant 0 : i32
    %c0_i32_1 = arith.constant 0 : i32
    return %c0_i32, %c0_i32_0 : i32, i32
  }
  func.func @transform_5(%arg0: i32) -> (i32, i32, i32) {
    %c0_i32 = arith.constant 0 : i32
    %c0_i32_0 = arith.constant 0 : i32
    %c0_i32_1 = arith.constant 0 : i32
    return %arg0, %c0_i32, %c0_i32_0 : i32, i32, i32
  }
}

</mosaic_0001>

<llo_original>
// kernel: tpu_custom_call.1
$region0: #{tpu_custom_call.1}
  #allocation0 [shape = 'u32[]', space=smem, size = 0x4, offset = 0x4, fixed_abs, tag = 'smem constant byte address 0x4 - core index']
  #allocation1 [shape = 'u32[144,128]{1,0:T(1,128)}', space=vmem, size = 0x12000, scoped, tag = 'internal scratch']
  #allocation2 [shape = 'bf16[2,32,128]{2,1,0:T(16,128)(2,1)}', space=vmem, size = 0x4000, scoped, tag = 'scratch operand']
  %s0 = inlined_call_operand.hbm [shape: f32[2,16,128], index: 0, kind: input, shape index: {}]
  %s1 = inlined_call_operand.hbm [shape: bf16[3,128,128], index: 1, kind: input, shape index: {}]
  %s2 = inlined_call_operand.vmem [shape: f32[1,128], index: 2, kind: input, shape index: {}]
  %s3 = inlined_call_operand.hbm [shape: bf16[3,128,128], index: 3, kind: input, shape index: {}]
  %s4 = inlined_call_operand.vmem [shape: f32[1,128], index: 4, kind: input, shape index: {}]
  %s5 = inlined_call_operand.hbm [shape: f32[2,16,128], index: 5, kind: output, shape index: {}]
  %s6 = sld [smem:[#allocation0]]
  $region46: #{tpu_custom_call.1} parent=0
    _
  %s8 = ssub.s32 1, %s6
  %s9 = scalar_select 0, %s8, %s6
  $region1: #{tpu_custom_call.1} parent=0
    #allocation3 [shape = 'u8[16384]{0}', space=vmem, size = 0x4000, scoped, tag = 'input window, operand 0, single buffered']
    #allocation4 [shape = 's32[1]{0}', space=sflag, size = 0x4, scoped, tag = 'scoped memory for tpu_custom_call.1']
    #allocation5 [shape = 's32[1]{0}', space=sflag, size = 0x4, scoped, tag = 'scoped memory for tpu_custom_call.1']
    #allocation6 [shape = 'u8[98304]{0}', space=vmem, size = 0x18000, scoped, tag = 'input window, operand 1, single buffered']
    #allocation7 [shape = 's32[1]{0}', space=sflag, size = 0x4, scoped, tag = 'scoped memory for tpu_custom_call.1']
    #allocation8 [shape = 'u8[98304]{0}', space=vmem, size = 0x18000, scoped, tag = 'input window, operand 3, single buffered']
    #allocation9 [shape = 'u8[16384]{0}', space=vmem, size = 0x4000, scoped, tag = 'output window, operand 0, single buffered']
    %10 = vsyncpa [#allocation4], 0
    %11 = vsyncpa [#allocation7], 0
    %12 = vsyncpa [#allocation5], 0
    // Predicated region
    $region2: #{tpu_custom_call.1} parent=1 // pred_check
      _
    $region3: #{tpu_custom_call.1} parent=1 // pred_check_branch
      %14 = sbr.rel (0) target = $region5
    $region4: #{tpu_custom_call.1} parent=1 // pred_region
      %s16 = ssub.s32 512, 512
      %17 = vsyncadd [#allocation4], %s16
      %s18 = sshll.u32 [#allocation3], 4
      %s19 = int_to_ptr.vmem [resolvable:$true] %s18
      %24 = dma.hbm_to_vmem [thread:$0]  %s0, 512, %s19, [#allocation4], 128, 128, 8
    $region5: #{tpu_custom_call.1} parent=1 // pred_fallthru
      _
    // Predicated region
    $region6: #{tpu_custom_call.1} parent=1 // pred_check
      _
    $region7: #{tpu_custom_call.1} parent=1 // pred_check_branch
      %26 = sbr.rel (0) target = $region9
    $region8: #{tpu_custom_call.1} parent=1 // pred_region
      %s28 = ssub.s32 3072, 3072
      %29 = vsyncadd [#allocation7], %s28
      %s30 = sshll.u32 [#allocation6], 4
      %s31 = int_to_ptr.vmem [resolvable:$true] %s30
      %36 = dma.hbm_to_vmem [thread:$0]  %s1, 3072, %s31, [#allocation7], 64, 64, 4
    $region9: #{tpu_custom_call.1} parent=1 // pred_fallthru
      _
    // Predicated region
    $region10: #{tpu_custom_call.1} parent=1 // pred_check
      _
    $region11: #{tpu_custom_call.1} parent=1 // pred_check_branch
      %38 = sbr.rel (0) target = $region13
    $region12: #{tpu_custom_call.1} parent=1 // pred_region
      _
    $region13: #{tpu_custom_call.1} parent=1 // pred_fallthru
      _
    // Predicated region
    $region14: #{tpu_custom_call.1} parent=1 // pred_check
      _
    $region15: #{tpu_custom_call.1} parent=1 // pred_check_branch
      %40 = sbr.rel (0) target = $region17
    $region16: #{tpu_custom_call.1} parent=1 // pred_region
      %s42 = ssub.s32 3072, 3072
      %43 = vsyncadd [#allocation7], %s42
      %s44 = sshll.u32 [#allocation8], 4
      %s45 = int_to_ptr.vmem [resolvable:$true] %s44
      %50 = dma.hbm_to_vmem [thread:$0]  %s3, 3072, %s45, [#allocation7], 64, 64, 4
    $region17: #{tpu_custom_call.1} parent=1 // pred_fallthru
      _
    // Predicated region
    $region18: #{tpu_custom_call.1} parent=1 // pred_check
      _
    $region19: #{tpu_custom_call.1} parent=1 // pred_check_branch
      %52 = sbr.rel (0) target = $region21
    $region20: #{tpu_custom_call.1} parent=1 // pred_region
      _
    $region21: #{tpu_custom_call.1} parent=1 // pred_fallthru
      _
    // Predicated region
    $region22: #{tpu_custom_call.1} parent=1 // pred_check
      _
    $region23: #{tpu_custom_call.1} parent=1 // pred_check_branch
      %54 = sbr.rel (0) target = $region25
    $region24: #{tpu_custom_call.1} parent=1 // pred_region
      %55 = dma.done [#allocation4], 512
    $region25: #{tpu_custom_call.1} parent=1 // pred_fallthru
      _
    // Predicated region
    $region26: #{tpu_custom_call.1} parent=1 // pred_check
      _
    $region27: #{tpu_custom_call.1} parent=1 // pred_check_branch
      %57 = sbr.rel (0) target = $region29
    $region28: #{tpu_custom_call.1} parent=1 // pred_region
      %58 = dma.done [#allocation7], 3072
    $region29: #{tpu_custom_call.1} parent=1 // pred_fallthru
      _
    // Predicated region
    $region30: #{tpu_custom_call.1} parent=1 // pred_check
      _
    $region31: #{tpu_custom_call.1} parent=1 // pred_check_branch
      %60 = sbr.rel (0) target = $region33
    $region32: #{tpu_custom_call.1} parent=1 // pred_region
      %61 = dma.done [#allocation7], 3072
    $region33: #{tpu_custom_call.1} parent=1 // pred_fallthru
      _
    %p63 = scmp.eq.s32.totalorder 0, 0
    // Predicated region
    $region34: #{tpu_custom_call.1} parent=1 // pred_check
      %p64 = pneg %p63
    $region35: #{tpu_custom_call.1} parent=1 // pred_check_branch
      %66 = sbr.rel (%p64) target = $region37
    $region36: #{tpu_custom_call.1} parent=1 // pred_region
      %67 = vst [vmem:[#allocation2] sm:$0xff] 0
      %68 = vst [vmem:[#allocation2 + $0x8] sm:$0xff] 0
      %69 = vst [vmem:[#allocation2 + $0x10] sm:$0xff] 0
      %70 = vst [vmem:[#allocation2 + $0x18] sm:$0xff] 0
    $region37: #{tpu_custom_call.1} parent=1 // pred_fallthru
      _
    %v71 = vld [vmem:[#allocation3] sm:$0xff]
    %v72 = vld [vmem:[#allocation3 + $0x8] sm:$0xff]
    %v73 = vld [vmem:[#allocation3 + $0x10] sm:$0xff]
    %v74 = vld [vmem:[#allocation3 + $0x18] sm:$0xff]
    %v75 = vpack.c.bf16 %v72, %v71
    %v76 = vpack.c.bf16 %v74, %v73
    %v79 = vrot.slane %v75, 4
    %v80 = vrot.slane %v76, 4
    %83 = vst [vmem:[#allocation2] sm:$0xf0] %v79
    %84 = vst [vmem:[#allocation2 + $0x8] sm:$0xf] %v79
    %85 = vst [vmem:[#allocation2 + $0x10] sm:$0xf0] %v80
    %86 = vst [vmem:[#allocation2 + $0x18] sm:$0xf] %v80
    %v87 = vld [vmem:[#allocation2] sm:$0xf8]
    %v88 = vld [vmem:[#allocation2 + $0x8] sm:$0xf]
    %v89 = vld [vmem:[#allocation2 + $0x10] sm:$0xf8]
    %v90 = vld [vmem:[#allocation2 + $0x18] sm:$0xf]
    %vm91 = vsmask.f32 4352
    %v93 = vshrl.u32 %v87, 16
    %v95 = vrot.slane %v93, 3
    %v96 = vshll.u32 %v87, 16
    %v98 = vrot.slane %v96, 4
    %v99 = vor.u32 %v95, %v98
    %v101 = vshrl.u32 %v88, 16
    %v103 = vrot.slane %v101, 3
    %v104 = vshll.u32 %v88, 16
    %v106 = vrot.slane %v104, 4
    %v107 = vor.u32 %v103, %v106
    %v108 = vsel %vm91, %v99, %v107
    %v110 = vshrl.u32 %v89, 16
    %v112 = vrot.slane %v110, 3
    %v113 = vshll.u32 %v89, 16
    %v115 = vrot.slane %v113, 4
    %v116 = vor.u32 %v112, %v115
    %v118 = vshrl.u32 %v90, 16
    %v120 = vrot.slane %v118, 3
    %v121 = vshll.u32 %v90, 16
    %v123 = vrot.slane %v121, 4
    %v124 = vor.u32 %v120, %v123
    %v125 = vsel %vm91, %v116, %v124
    %v128 = vld [vmem:[#allocation6] sm:$0xf]
    %v129 = vld [vmem:[#allocation6 + $0x4] sm:$0xf]
    %v130 = vld [vmem:[#allocation6 + $0x8] sm:$0xf]
    %v131 = vld [vmem:[#allocation6 + $0xc] sm:$0xf]
    %v132 = vld [vmem:[#allocation6 + $0x10] sm:$0xf]
    %v133 = vld [vmem:[#allocation6 + $0x14] sm:$0xf]
    %v134 = vld [vmem:[#allocation6 + $0x18] sm:$0xf]
    %v135 = vld [vmem:[#allocation6 + $0x1c] sm:$0xf]
    %v136 = vld [vmem:[#allocation6 + $0x20] sm:$0xf]
    %v137 = vld [vmem:[#allocation6 + $0x24] sm:$0xf]
    %v138 = vld [vmem:[#allocation6 + $0x28] sm:$0xf]
    %v139 = vld [vmem:[#allocation6 + $0x2c] sm:$0xf]
    %v140 = vld [vmem:[#allocation6 + $0x30] sm:$0xf]
    %v141 = vld [vmem:[#allocation6 + $0x34] sm:$0xf]
    %v142 = vld [vmem:[#allocation6 + $0x38] sm:$0xf]
    %v143 = vld [vmem:[#allocation6 + $0x3c] sm:$0xf]
    %v144 = vld [vmem:[#allocation2] sm:$0xf0]
    %v145 = vld [vmem:[#allocation2 + $0x10] sm:$0xf0]
    %vm150 = vcmask 1043456
    %v151 = vrot.slane %v144, 4
    %v152 = vrot.slane %v88, 4
    %v153 = vsel %vm150, %v151, %v152
    %v154 = vrot.slane %v145, 4
    %v155 = vrot.slane %v90, 4
    %v156 = vsel %vm150, %v154, %v155
    %s159 = scalar_lea.vmem [#allocation6], 64
    %v160 = vld [vmem:[%s159] sm:$0xf]
    %v161 = vld [vmem:[%s159 + $0x4] sm:$0xf]
    %v162 = vld [vmem:[%s159 + $0x8] sm:$0xf]
    %v163 = vld [vmem:[%s159 + $0xc] sm:$0xf]
    %v164 = vld [vmem:[%s159 + $0x10] sm:$0xf]
    %v165 = vld [vmem:[%s159 + $0x14] sm:$0xf]
    %v166 = vld [vmem:[%s159 + $0x18] sm:$0xf]
    %v167 = vld [vmem:[%s159 + $0x1c] sm:$0xf]
    %v168 = vld [vmem:[%s159 + $0x20] sm:$0xf]
    %v169 = vld [vmem:[%s159 + $0x24] sm:$0xf]
    %v170 = vld [vmem:[%s159 + $0x28] sm:$0xf]
    %v171 = vld [vmem:[%s159 + $0x2c] sm:$0xf]
    %v172 = vld [vmem:[%s159 + $0x30] sm:$0xf]
    %v173 = vld [vmem:[%s159 + $0x34] sm:$0xf]
    %v174 = vld [vmem:[%s159 + $0x38] sm:$0xf]
    %v175 = vld [vmem:[%s159 + $0x3c] sm:$0xf]
    %v192 = vunpack.c.l.b16 %v160
    %v193 = vunpack.c.l.b16 %v161
    %v194 = vunpack.c.l.b16 %v162
    %v195 = vunpack.c.l.b16 %v163
    %v196 = vunpack.c.l.b16 %v164
    %v197 = vunpack.c.l.b16 %v165
    %v198 = vunpack.c.l.b16 %v166
    %v199 = vunpack.c.l.b16 %v167
    %v200 = vunpack.c.l.b16 %v168
    %v201 = vunpack.c.l.b16 %v169
    %v202 = vunpack.c.l.b16 %v170
    %v203 = vunpack.c.l.b16 %v171
    %v204 = vunpack.c.l.b16 %v172
    %v205 = vunpack.c.l.b16 %v173
    %v206 = vunpack.c.l.b16 %v174
    %v207 = vunpack.c.l.b16 %v175
    %v208 = vpack.c.b16 %v193, %v192
    %v209 = vpack.c.b16 %v195, %v194
    %v210 = vpack.c.b16 %v197, %v196
    %v211 = vpack.c.b16 %v199, %v198
    %v212 = vpack.c.b16 %v201, %v200
    %v213 = vpack.c.b16 %v203, %v202
    %v214 = vpack.c.b16 %v205, %v204
    %v215 = vpack.c.b16 %v207, %v206
    %224 = vmatprep.subr.bf16.mxu0 0
    %225 = vmatpush1.bf16.msra.mxu0 %v208
    %226 = vmatprep.subr.bf16.mxu0 0
    %227 = vmatpush1.bf16.msra.mxu0 %v209
    %228 = vmatprep.subr.bf16.mxu0 0
    %229 = vmatpush1.bf16.msra.mxu0 %v210
    %230 = vmatprep.subr.bf16.mxu0 0
    %231 = vmatpush1.bf16.msra.mxu0 %v211
    %232 = vmatprep.subr.bf16.mxu0 0
    %233 = vmatpush1.bf16.msra.mxu0 %v212
    %234 = vmatprep.subr.bf16.mxu0 0
    %235 = vmatpush1.bf16.msra.mxu0 %v213
    %236 = vmatprep.subr.bf16.mxu0 0
    %237 = vmatpush1.bf16.msra.mxu0 %v214
    %238 = vmatprep.subr.bf16.mxu0 0
    %239 = vmatpush1.bf16.msra.mxu0 %v215
    %240 = vmatprep.subr.bf16.mxu0 0
    %241 = vmatpush1.bf16.msra.mxu0 0
    %242 = vmatprep.subr.bf16.mxu0 0
    %243 = vmatpush1.bf16.msra.mxu0 0
    %244 = vmatprep.subr.bf16.mxu0 0
    %245 = vmatpush1.bf16.msra.mxu0 0
    %246 = vmatprep.subr.bf16.mxu0 0
    %247 = vmatpush1.bf16.msra.mxu0 0
    %248 = vmatprep.subr.bf16.mxu0 0
    %249 = vmatpush1.bf16.msra.mxu0 0
    %250 = vmatprep.subr.bf16.mxu0 0
    %251 = vmatpush1.bf16.msra.mxu0 0
    %252 = vmatprep.subr.bf16.mxu0 0
    %253 = vmatpush1.bf16.msra.mxu0 0
    %254 = vmatprep.subr.bf16.mxu0 0
    %255 = vmatpush1.bf16.msra.mxu0 0
    %256 = vmatprep.mubr.bf16.mxu0 0
    %257 = vmatmul.mubr.bf16.gmra.mrb[0].mxu0 %v153
    %v258 = vpop.f32.mrb[0].mxu0
    %v259 = vadd.f32 0.0, %v258
    %v260 = vpop.f32.mrb[0].mxu0
    %v261 = vpop.f32.mrb[0].mxu0
    %v262 = vadd.f32 0.0, %v261
    %v263 = vpop.f32.mrb[0].mxu0
    %264 = vmatprep.mubr.bf16.mxu0 0
    %265 = vmatmul.mubr.bf16.gmra.mrb[0].mxu0 %v156
    %v266 = vpop.f32.mrb[0].mxu0
    %v267 = vadd.f32 0.0, %v266
    %v268 = vpop.f32.mrb[0].mxu0
    %v269 = vpop.f32.mrb[0].mxu0
    %v270 = vadd.f32 0.0, %v269
    %v271 = vpop.f32.mrb[0].mxu0
    %272 = vdwg.mxu0
    %v289 = vunpack.c.l.b16 %v128
    %v290 = vunpack.c.l.b16 %v129
    %v291 = vunpack.c.l.b16 %v130
    %v292 = vunpack.c.l.b16 %v131
    %v293 = vunpack.c.l.b16 %v132
    %v294 = vunpack.c.l.b16 %v133
    %v295 = vunpack.c.l.b16 %v134
    %v296 = vunpack.c.l.b16 %v135
    %v297 = vunpack.c.l.b16 %v136
    %v298 = vunpack.c.l.b16 %v137
    %v299 = vunpack.c.l.b16 %v138
    %v300 = vunpack.c.l.b16 %v139
    %v301 = vunpack.c.l.b16 %v140
    %v302 = vunpack.c.l.b16 %v141
    %v303 = vunpack.c.l.b16 %v142
    %v304 = vunpack.c.l.b16 %v143
    %v305 = vpack.c.b16 %v290, %v289
    %v306 = vpack.c.b16 %v292, %v291
    %v307 = vpack.c.b16 %v294, %v293
    %v308 = vpack.c.b16 %v296, %v295
    %v309 = vpack.c.b16 %v298, %v297
    %v310 = vpack.c.b16 %v300, %v299
    %v311 = vpack.c.b16 %v302, %v301
    %v312 = vpack.c.b16 %v304, %v303
    %321 = vmatprep.subr.bf16.mxu0 0
    %322 = vmatpush1.bf16.msra.mxu0 %v305
    %323 = vmatprep.subr.bf16.mxu0 0
    %324 = vmatpush1.bf16.msra.mxu0 %v306
    %325 = vmatprep.subr.bf16.mxu0 0
    %326 = vmatpush1.bf16.msra.mxu0 %v307
    %327 = vmatprep.subr.bf16.mxu0 0
    %328 = vmatpush1.bf16.msra.mxu0 %v308
    %329 = vmatprep.subr.bf16.mxu0 0
    %330 = vmatpush1.bf16.msra.mxu0 %v309
    %331 = vmatprep.subr.bf16.mxu0 0
    %332 = vmatpush1.bf16.msra.mxu0 %v310
    %333 = vmatprep.subr.bf16.mxu0 0
    %334 = vmatpush1.bf16.msra.mxu0 %v311
    %335 = vmatprep.subr.bf16.mxu0 0
    %336 = vmatpush1.bf16.msra.mxu0 %v312
    %337 = vmatprep.subr.bf16.mxu0 0
    %338 = vmatpush1.bf16.msra.mxu0 0
    %339 = vmatprep.subr.bf16.mxu0 0
    %340 = vmatpush1.bf16.msra.mxu0 0
    %341 = vmatprep.subr.bf16.mxu0 0
    %342 = vmatpush1.bf16.msra.mxu0 0
    %343 = vmatprep.subr.bf16.mxu0 0
    %344 = vmatpush1.bf16.msra.mxu0 0
    %345 = vmatprep.subr.bf16.mxu0 0
    %346 = vmatpush1.bf16.msra.mxu0 0
    %347 = vmatprep.subr.bf16.mxu0 0
    %348 = vmatpush1.bf16.msra.mxu0 0
    %349 = vmatprep.subr.bf16.mxu0 0
    %350 = vmatpush1.bf16.msra.mxu0 0
    %351 = vmatprep.subr.bf16.mxu0 0
    %352 = vmatpush1.bf16.msra.mxu0 0
    %353 = vmatprep.mubr.bf16.mxu0 0
    %354 = vmatmul.mubr.bf16.gmra.mrb[0].mxu0 %v108
    %v355 = vpop.f32.mrb[0].mxu0
    %v356 = vadd.f32 %v259, %v355
    %v357 = vpop.f32.mrb[0].mxu0
    %v358 = vpop.f32.mrb[0].mxu0
    %v359 = vadd.f32 %v262, %v358
    %v360 = vpop.f32.mrb[0].mxu0
    %361 = vmatprep.mubr.bf16.mxu0 0
    %362 = vmatmul.mubr.bf16.gmra.mrb[0].mxu0 %v125
    %v363 = vpop.f32.mrb[0].mxu0
    %v364 = vadd.f32 %v267, %v363
    %v365 = vpop.f32.mrb[0].mxu0
    %v366 = vpop.f32.mrb[0].mxu0
    %v367 = vadd.f32 %v270, %v366
    %v368 = vpop.f32.mrb[0].mxu0
    %369 = vdwg.mxu0
    %v370 = vld [vmem:[#allocation2 + $0x8] sm:$0x1f]
    %v371 = vld [vmem:[#allocation2 + $0x18] sm:$0x1f]
    %vm372 = vsmask.f32 3328
    %v374 = vshrl.u32 %v144, 16
    %v376 = vrot.slane %v374, 4
    %v377 = vshll.u32 %v144, 16
    %v379 = vrot.slane %v377, 5
    %v380 = vor.u32 %v376, %v379
    %v382 = vshrl.u32 %v370, 16
    %v384 = vrot.slane %v382, 4
    %v385 = vshll.u32 %v370, 16
    %v387 = vrot.slane %v385, 5
    %v388 = vor.u32 %v384, %v387
    %v389 = vsel %vm372, %v380, %v388
    %v391 = vshrl.u32 %v145, 16
    %v393 = vrot.slane %v391, 4
    %v394 = vshll.u32 %v145, 16
    %v396 = vrot.slane %v394, 5
    %v397 = vor.u32 %v393, %v396
    %v399 = vshrl.u32 %v371, 16
    %v401 = vrot.slane %v399, 4
    %v402 = vshll.u32 %v371, 16
    %v404 = vrot.slane %v402, 5
    %v405 = vor.u32 %v401, %v404
    %v406 = vsel %vm372, %v397, %v405
    %s409 = scalar_lea.vmem [#allocation6], 128
    %v410 = vld [vmem:[%s409] sm:$0xf]
    %v411 = vld [vmem:[%s409 + $0x4] sm:$0xf]
    %v412 = vld [vmem:[%s409 + $0x8] sm:$0xf]
    %v413 = vld [vmem:[%s409 + $0xc] sm:$0xf]
    %v414 = vld [vmem:[%s409 + $0x10] sm:$0xf]
    %v415 = vld [vmem:[%s409 + $0x14] sm:$0xf]
    %v416 = vld [vmem:[%s409 + $0x18] sm:$0xf]
    %v417 = vld [vmem:[%s409 + $0x1c] sm:$0xf]
    %v418 = vld [vmem:[%s409 + $0x20] sm:$0xf]
    %v419 = vld [vmem:[%s409 + $0x24] sm:$0xf]
    %v420 = vld [vmem:[%s409 + $0x28] sm:$0xf]
    %v421 = vld [vmem:[%s409 + $0x2c] sm:$0xf]
    %v422 = vld [vmem:[%s409 + $0x30] sm:$0xf]
    %v423 = vld [vmem:[%s409 + $0x34] sm:$0xf]
    %v424 = vld [vmem:[%s409 + $0x38] sm:$0xf]
    %v425 = vld [vmem:[%s409 + $0x3c] sm:$0xf]
    %v442 = vunpack.c.l.b16 %v410
    %v443 = vunpack.c.l.b16 %v411
    %v444 = vunpack.c.l.b16 %v412
    %v445 = vunpack.c.l.b16 %v413
    %v446 = vunpack.c.l.b16 %v414
    %v447 = vunpack.c.l.b16 %v415
    %v448 = vunpack.c.l.b16 %v416
    %v449 = vunpack.c.l.b16 %v417
    %v450 = vunpack.c.l.b16 %v418
    %v451 = vunpack.c.l.b16 %v419
    %v452 = vunpack.c.l.b16 %v420
    %v453 = vunpack.c.l.b16 %v421
    %v454 = vunpack.c.l.b16 %v422
    %v455 = vunpack.c.l.b16 %v423
    %v456 = vunpack.c.l.b16 %v424
    %v457 = vunpack.c.l.b16 %v425
    %v458 = vpack.c.b16 %v443, %v442
    %v459 = vpack.c.b16 %v445, %v444
    %v460 = vpack.c.b16 %v447, %v446
    %v461 = vpack.c.b16 %v449, %v448
    %v462 = vpack.c.b16 %v451, %v450
    %v463 = vpack.c.b16 %v453, %v452
    %v464 = vpack.c.b16 %v455, %v454
    %v465 = vpack.c.b16 %v457, %v456
    %474 = vmatprep.subr.bf16.mxu0 0
    %475 = vmatpush1.bf16.msra.mxu0 %v458
    %476 = vmatprep.subr.bf16.mxu0 0
    %477 = vmatpush1.bf16.msra.mxu0 %v459
    %478 = vmatprep.subr.bf16.mxu0 0
    %479 = vmatpush1.bf16.msra.mxu0 %v460
    %480 = vmatprep.subr.bf16.mxu0 0
    %481 = vmatpush1.bf16.msra.mxu0 %v461
    %482 = vmatprep.subr.bf16.mxu0 0
    %483 = vmatpush1.bf16.msra.mxu0 %v462
    %484 = vmatprep.subr.bf16.mxu0 0
    %485 = vmatpush1.bf16.msra.mxu0 %v463
    %486 = vmatprep.subr.bf16.mxu0 0
    %487 = vmatpush1.bf16.msra.mxu0 %v464
    %488 = vmatprep.subr.bf16.mxu0 0
    %489 = vmatpush1.bf16.msra.mxu0 %v465
    %490 = vmatprep.subr.bf16.mxu0 0
    %491 = vmatpush1.bf16.msra.mxu0 0
    %492 = vmatprep.subr.bf16.mxu0 0
    %493 = vmatpush1.bf16.msra.mxu0 0
    %494 = vmatprep.subr.bf16.mxu0 0
    %495 = vmatpush1.bf16.msra.mxu0 0
    %496 = vmatprep.subr.bf16.mxu0 0
    %497 = vmatpush1.bf16.msra.mxu0 0
    %498 = vmatprep.subr.bf16.mxu0 0
    %499 = vmatpush1.bf16.msra.mxu0 0
    %500 = vmatprep.subr.bf16.mxu0 0
    %501 = vmatpush1.bf16.msra.mxu0 0
    %502 = vmatprep.subr.bf16.mxu0 0
    %503 = vmatpush1.bf16.msra.mxu0 0
    %504 = vmatprep.subr.bf16.mxu0 0
    %505 = vmatpush1.bf16.msra.mxu0 0
    %506 = vmatprep.mubr.bf16.mxu0 0
    %507 = vmatmul.mubr.bf16.gmra.mrb[0].mxu0 %v389
    %v508 = vpop.f32.mrb[0].mxu0
    %v509 = vadd.f32 0.0, %v508
    %v510 = vpop.f32.mrb[0].mxu0
    %v511 = vpop.f32.mrb[0].mxu0
    %v512 = vadd.f32 0.0, %v511
    %v513 = vpop.f32.mrb[0].mxu0
    %514 = vmatprep.mubr.bf16.mxu0 0
    %515 = vmatmul.mubr.bf16.gmra.mrb[0].mxu0 %v406
    %v516 = vpop.f32.mrb[0].mxu0
    %v517 = vadd.f32 0.0, %v516
    %v518 = vpop.f32.mrb[0].mxu0
    %v519 = vpop.f32.mrb[0].mxu0
    %v520 = vadd.f32 0.0, %v519
    %v521 = vpop.f32.mrb[0].mxu0
    %522 = vdwg.mxu0
    %v523 = vadd.f32 %v356, %v509
    %v524 = vadd.f32 %v359, %v512
    %v525 = vadd.f32 %v364, %v517
    %v526 = vadd.f32 %v367, %v520
    %v527 = vld [vmem:[%s2] sm:$0x1]
    %v529 = vlaneseq
    %v530 = vshrl.u32 %v529, 7
    %v531 = vsub.s32 0, %v530
    %v532 = vrot.slane %v527, %v531
    %v534 = vadd.f32 %v523, %v532
    %v535 = vadd.f32 %v524, %v532
    %v536 = vadd.f32 %v525, %v532
    %v537 = vadd.f32 %v526, %v532
    %v538 = vmax.f32 %v534, 0.0
    %v539 = vmax.f32 %v535, 0.0
    %v540 = vmax.f32 %v536, 0.0
    %v541 = vmax.f32 %v537, 0.0
    %v542 = vpack.c.bf16 %v539, %v538
    %v543 = vpack.c.bf16 %v541, %v540
    %v546 = vrot.slane %v542, 4
    %v547 = vrot.slane %v543, 4
    %550 = vst [vmem:[#allocation2] sm:$0xf0] %v546
    %551 = vst [vmem:[#allocation2 + $0x8] sm:$0xf] %v546
    %552 = vst [vmem:[#allocation2 + $0x10] sm:$0xf0] %v547
    %553 = vst [vmem:[#allocation2 + $0x18] sm:$0xf] %v547
    %v554 = vld [vmem:[#allocation2] sm:$0xf8]
    %v555 = vld [vmem:[#allocation2 + $0x8] sm:$0xf]
    %v556 = vld [vmem:[#allocation2 + $0x10] sm:$0xf8]
    %v557 = vld [vmem:[#allocation2 + $0x18] sm:$0xf]
    %v559 = vshrl.u32 %v554, 16
    %v561 = vrot.slane %v559, 3
    %v562 = vshll.u32 %v554, 16
    %v564 = vrot.slane %v562, 4
    %v565 = vor.u32 %v561, %v564
    %v567 = vshrl.u32 %v555, 16
    %v569 = vrot.slane %v567, 3
    %v570 = vshll.u32 %v555, 16
    %v572 = vrot.slane %v570, 4
    %v573 = vor.u32 %v569, %v572
    %v574 = vsel %vm91, %v565, %v573
    %v576 = vshrl.u32 %v556, 16
    %v578 = vrot.slane %v576, 3
    %v579 = vshll.u32 %v556, 16
    %v581 = vrot.slane %v579, 4
    %v582 = vor.u32 %v578, %v581
    %v584 = vshrl.u32 %v557, 16
    %v586 = vrot.slane %v584, 3
    %v587 = vshll.u32 %v557, 16
    %v589 = vrot.slane %v587, 4
    %v590 = vor.u32 %v586, %v589
    %v591 = vsel %vm91, %v582, %v590
    %v594 = vld [vmem:[#allocation8] sm:$0xf]
    %v595 = vld [vmem:[#allocation8 + $0x4] sm:$0xf]
    %v596 = vld [vmem:[#allocation8 + $0x8] sm:$0xf]
    %v597 = vld [vmem:[#allocation8 + $0xc] sm:$0xf]
    %v598 = vld [vmem:[#allocation8 + $0x10] sm:$0xf]
    %v599 = vld [vmem:[#allocation8 + $0x14] sm:$0xf]
    %v600 = vld [vmem:[#allocation8 + $0x18] sm:$0xf]
    %v601 = vld [vmem:[#allocation8 + $0x1c] sm:$0xf]
    %v602 = vld [vmem:[#allocation8 + $0x20] sm:$0xf]
    %v603 = vld [vmem:[#allocation8 + $0x24] sm:$0xf]
    %v604 = vld [vmem:[#allocation8 + $0x28] sm:$0xf]
    %v605 = vld [vmem:[#allocation8 + $0x2c] sm:$0xf]
    %v606 = vld [vmem:[#allocation8 + $0x30] sm:$0xf]
    %v607 = vld [vmem:[#allocation8 + $0x34] sm:$0xf]
    %v608 = vld [vmem:[#allocation8 + $0x38] sm:$0xf]
    %v609 = vld [vmem:[#allocation8 + $0x3c] sm:$0xf]
    %v610 = vld [vmem:[#allocation2] sm:$0xf0]
    %v611 = vld [vmem:[#allocation2 + $0x10] sm:$0xf0]
    %v616 = vrot.slane %v610, 4
    %v617 = vrot.slane %v555, 4
    %v618 = vsel %vm150, %v616, %v617
    %v619 = vrot.slane %v611, 4
    %v620 = vrot.slane %v557, 4
    %v621 = vsel %vm150, %v619, %v620
    %s624 = scalar_lea.vmem [#allocation8], 64
    %v625 = vld [vmem:[%s624] sm:$0xf]
    %v626 = vld [vmem:[%s624 + $0x4] sm:$0xf]
    %v627 = vld [vmem:[%s624 + $0x8] sm:$0xf]
    %v628 = vld [vmem:[%s624 + $0xc] sm:$0xf]
    %v629 = vld [vmem:[%s624 + $0x10] sm:$0xf]
    %v630 = vld [vmem:[%s624 + $0x14] sm:$0xf]
    %v631 = vld [vmem:[%s624 + $0x18] sm:$0xf]
    %v632 = vld [vmem:[%s624 + $0x1c] sm:$0xf]
    %v633 = vld [vmem:[%s624 + $0x20] sm:$0xf]
    %v634 = vld [vmem:[%s624 + $0x24] sm:$0xf]
    %v635 = vld [vmem:[%s624 + $0x28] sm:$0xf]
    %v636 = vld [vmem:[%s624 + $0x2c] sm:$0xf]
    %v637 = vld [vmem:[%s624 + $0x30] sm:$0xf]
    %v638 = vld [vmem:[%s624 + $0x34] sm:$0xf]
    %v639 = vld [vmem:[%s624 + $0x38] sm:$0xf]
    %v640 = vld [vmem:[%s624 + $0x3c] sm:$0xf]
    %v657 = vunpack.c.l.b16 %v625
    %v658 = vunpack.c.l.b16 %v626
    %v659 = vunpack.c.l.b16 %v627
    %v660 = vunpack.c.l.b16 %v628
    %v661 = vunpack.c.l.b16 %v629
    %v662 = vunpack.c.l.b16 %v630
    %v663 = vunpack.c.l.b16 %v631
    %v664 = vunpack.c.l.b16 %v632
    %v665 = vunpack.c.l.b16 %v633
    %v666 = vunpack.c.l.b16 %v634
    %v667 = vunpack.c.l.b16 %v635
    %v668 = vunpack.c.l.b16 %v636
    %v669 = vunpack.c.l.b16 %v637
    %v670 = vunpack.c.l.b16 %v638
    %v671 = vunpack.c.l.b16 %v639
    %v672 = vunpack.c.l.b16 %v640
    %v673 = vpack.c.b16 %v658, %v657
    %v674 = vpack.c.b16 %v660, %v659
    %v675 = vpack.c.b16 %v662, %v661
    %v676 = vpack.c.b16 %v664, %v663
    %v677 = vpack.c.b16 %v666, %v665
    %v678 = vpack.c.b16 %v668, %v667
    %v679 = vpack.c.b16 %v670, %v669
    %v680 = vpack.c.b16 %v672, %v671
    %689 = vmatprep.subr.bf16.mxu0 0
    %690 = vmatpush1.bf16.msra.mxu0 %v673
    %691 = vmatprep.subr.bf16.mxu0 0
    %692 = vmatpush1.bf16.msra.mxu0 %v674
    %693 = vmatprep.subr.bf16.mxu0 0
    %694 = vmatpush1.bf16.msra.mxu0 %v675
    %695 = vmatprep.subr.bf16.mxu0 0
    %696 = vmatpush1.bf16.msra.mxu0 %v676
    %697 = vmatprep.subr.bf16.mxu0 0
    %698 = vmatpush1.bf16.msra.mxu0 %v677
    %699 = vmatprep.subr.bf16.mxu0 0
    %700 = vmatpush1.bf16.msra.mxu0 %v678
    %701 = vmatprep.subr.bf16.mxu0 0
    %702 = vmatpush1.bf16.msra.mxu0 %v679
    %703 = vmatprep.subr.bf16.mxu0 0
    %704 = vmatpush1.bf16.msra.mxu0 %v680
    %705 = vmatprep.subr.bf16.mxu0 0
    %706 = vmatpush1.bf16.msra.mxu0 0
    %707 = vmatprep.subr.bf16.mxu0 0
    %708 = vmatpush1.bf16.msra.mxu0 0
    %709 = vmatprep.subr.bf16.mxu0 0
    %710 = vmatpush1.bf16.msra.mxu0 0
    %711 = vmatprep.subr.bf16.mxu0 0
    %712 = vmatpush1.bf16.msra.mxu0 0
    %713 = vmatprep.subr.bf16.mxu0 0
    %714 = vmatpush1.bf16.msra.mxu0 0
    %715 = vmatprep.subr.bf16.mxu0 0
    %716 = vmatpush1.bf16.msra.mxu0 0
    %717 = vmatprep.subr.bf16.mxu0 0
    %718 = vmatpush1.bf16.msra.mxu0 0
    %719 = vmatprep.subr.bf16.mxu0 0
    %720 = vmatpush1.bf16.msra.mxu0 0
    %721 = vmatprep.mubr.bf16.mxu0 0
    %722 = vmatmul.mubr.bf16.gmra.mrb[0].mxu0 %v618
    %v723 = vpop.f32.mrb[0].mxu0
    %v724 = vadd.f32 0.0, %v723
    %v725 = vpop.f32.mrb[0].mxu0
    %v726 = vpop.f32.mrb[0].mxu0
    %v727 = vadd.f32 0.0, %v726
    %v728 = vpop.f32.mrb[0].mxu0
    %729 = vmatprep.mubr.bf16.mxu0 0
    %730 = vmatmul.mubr.bf16.gmra.mrb[0].mxu0 %v621
    %v731 = vpop.f32.mrb[0].mxu0
    %v732 = vadd.f32 0.0, %v731
    %v733 = vpop.f32.mrb[0].mxu0
    %v734 = vpop.f32.mrb[0].mxu0
    %v735 = vadd.f32 0.0, %v734
    %v736 = vpop.f32.mrb[0].mxu0
    %737 = vdwg.mxu0
    %v754 = vunpack.c.l.b16 %v594
    %v755 = vunpack.c.l.b16 %v595
    %v756 = vunpack.c.l.b16 %v596
    %v757 = vunpack.c.l.b16 %v597
    %v758 = vunpack.c.l.b16 %v598
    %v759 = vunpack.c.l.b16 %v599
    %v760 = vunpack.c.l.b16 %v600
    %v761 = vunpack.c.l.b16 %v601
    %v762 = vunpack.c.l.b16 %v602
    %v763 = vunpack.c.l.b16 %v603
    %v764 = vunpack.c.l.b16 %v604
    %v765 = vunpack.c.l.b16 %v605
    %v766 = vunpack.c.l.b16 %v606
    %v767 = vunpack.c.l.b16 %v607
    %v768 = vunpack.c.l.b16 %v608
    %v769 = vunpack.c.l.b16 %v609
    %v770 = vpack.c.b16 %v755, %v754
    %v771 = vpack.c.b16 %v757, %v756
    %v772 = vpack.c.b16 %v759, %v758
    %v773 = vpack.c.b16 %v761, %v760
    %v774 = vpack.c.b16 %v763, %v762
    %v775 = vpack.c.b16 %v765, %v764
    %v776 = vpack.c.b16 %v767, %v766
    %v777 = vpack.c.b16 %v769, %v768
    %786 = vmatprep.subr.bf16.mxu0 0
    %787 = vmatpush1.bf16.msra.mxu0 %v770
    %788 = vmatprep.subr.bf16.mxu0 0
    %789 = vmatpush1.bf16.msra.mxu0 %v771
    %790 = vmatprep.subr.bf16.mxu0 0
    %791 = vmatpush1.bf16.msra.mxu0 %v772
    %792 = vmatprep.subr.bf16.mxu0 0
    %793 = vmatpush1.bf16.msra.mxu0 %v773
    %794 = vmatprep.subr.bf16.mxu0 0
    %795 = vmatpush1.bf16.msra.mxu0 %v774
    %796 = vmatprep.subr.bf16.mxu0 0
    %797 = vmatpush1.bf16.msra.mxu0 %v775
    %798 = vmatprep.subr.bf16.mxu0 0
    %799 = vmatpush1.bf16.msra.mxu0 %v776
    %800 = vmatprep.subr.bf16.mxu0 0
    %801 = vmatpush1.bf16.msra.mxu0 %v777
    %802 = vmatprep.subr.bf16.mxu0 0
    %803 = vmatpush1.bf16.msra.mxu0 0
    %804 = vmatprep.subr.bf16.mxu0 0
    %805 = vmatpush1.bf16.msra.mxu0 0
    %806 = vmatprep.subr.bf16.mxu0 0
    %807 = vmatpush1.bf16.msra.mxu0 0
    %808 = vmatprep.subr.bf16.mxu0 0
    %809 = vmatpush1.bf16.msra.mxu0 0
    %810 = vmatprep.subr.bf16.mxu0 0
    %811 = vmatpush1.bf16.msra.mxu0 0
    %812 = vmatprep.subr.bf16.mxu0 0
    %813 = vmatpush1.bf16.msra.mxu0 0
    %814 = vmatprep.subr.bf16.mxu0 0
    %815 = vmatpush1.bf16.msra.mxu0 0
    %816 = vmatprep.subr.bf16.mxu0 0
    %817 = vmatpush1.bf16.msra.mxu0 0
    %818 = vmatprep.mubr.bf16.mxu0 0
    %819 = vmatmul.mubr.bf16.gmra.mrb[0].mxu0 %v574
    %v820 = vpop.f32.mrb[0].mxu0
    %v821 = vadd.f32 %v724, %v820
    %v822 = vpop.f32.mrb[0].mxu0
    %v823 = vpop.f32.mrb[0].mxu0
    %v824 = vadd.f32 %v727, %v823
    %v825 = vpop.f32.mrb[0].mxu0
    %826 = vmatprep.mubr.bf16.mxu0 0
    %827 = vmatmul.mubr.bf16.gmra.mrb[0].mxu0 %v591
    %v828 = vpop.f32.mrb[0].mxu0
    %v829 = vadd.f32 %v732, %v828
    %v830 = vpop.f32.mrb[0].mxu0
    %v831 = vpop.f32.mrb[0].mxu0
    %v832 = vadd.f32 %v735, %v831
    %v833 = vpop.f32.mrb[0].mxu0
    %834 = vdwg.mxu0
    %v835 = vld [vmem:[#allocation2 + $0x8] sm:$0x1f]
    %v836 = vld [vmem:[#allocation2 + $0x18] sm:$0x1f]
    %v838 = vshrl.u32 %v610, 16
    %v840 = vrot.slane %v838, 4
    %v841 = vshll.u32 %v610, 16
    %v843 = vrot.slane %v841, 5
    %v844 = vor.u32 %v840, %v843
    %v846 = vshrl.u32 %v835, 16
    %v848 = vrot.slane %v846, 4
    %v849 = vshll.u32 %v835, 16
    %v851 = vrot.slane %v849, 5
    %v852 = vor.u32 %v848, %v851
    %v853 = vsel %vm372, %v844, %v852
    %v855 = vshrl.u32 %v611, 16
    %v857 = vrot.slane %v855, 4
    %v858 = vshll.u32 %v611, 16
    %v860 = vrot.slane %v858, 5
    %v861 = vor.u32 %v857, %v860
    %v863 = vshrl.u32 %v836, 16
    %v865 = vrot.slane %v863, 4
    %v866 = vshll.u32 %v836, 16
    %v868 = vrot.slane %v866, 5
    %v869 = vor.u32 %v865, %v868
    %v870 = vsel %vm372, %v861, %v869
    %s873 = scalar_lea.vmem [#allocation8], 128
    %v874 = vld [vmem:[%s873] sm:$0xf]
    %v875 = vld [vmem:[%s873 + $0x4] sm:$0xf]
    %v876 = vld [vmem:[%s873 + $0x8] sm:$0xf]
    %v877 = vld [vmem:[%s873 + $0xc] sm:$0xf]
    %v878 = vld [vmem:[%s873 + $0x10] sm:$0xf]
    %v879 = vld [vmem:[%s873 + $0x14] sm:$0xf]
    %v880 = vld [vmem:[%s873 + $0x18] sm:$0xf]
    %v881 = vld [vmem:[%s873 + $0x1c] sm:$0xf]
    %v882 = vld [vmem:[%s873 + $0x20] sm:$0xf]
    %v883 = vld [vmem:[%s873 + $0x24] sm:$0xf]
    %v884 = vld [vmem:[%s873 + $0x28] sm:$0xf]
    %v885 = vld [vmem:[%s873 + $0x2c] sm:$0xf]
    %v886 = vld [vmem:[%s873 + $0x30] sm:$0xf]
    %v887 = vld [vmem:[%s873 + $0x34] sm:$0xf]
    %v888 = vld [vmem:[%s873 + $0x38] sm:$0xf]
    %v889 = vld [vmem:[%s873 + $0x3c] sm:$0xf]
    %v906 = vunpack.c.l.b16 %v874
    %v907 = vunpack.c.l.b16 %v875
    %v908 = vunpack.c.l.b16 %v876
    %v909 = vunpack.c.l.b16 %v877
    %v910 = vunpack.c.l.b16 %v878
    %v911 = vunpack.c.l.b16 %v879
    %v912 = vunpack.c.l.b16 %v880
    %v913 = vunpack.c.l.b16 %v881
    %v914 = vunpack.c.l.b16 %v882
    %v915 = vunpack.c.l.b16 %v883
    %v916 = vunpack.c.l.b16 %v884
    %v917 = vunpack.c.l.b16 %v885
    %v918 = vunpack.c.l.b16 %v886
    %v919 = vunpack.c.l.b16 %v887
    %v920 = vunpack.c.l.b16 %v888
    %v921 = vunpack.c.l.b16 %v889
    %v922 = vpack.c.b16 %v907, %v906
    %v923 = vpack.c.b16 %v909, %v908
    %v924 = vpack.c.b16 %v911, %v910
    %v925 = vpack.c.b16 %v913, %v912
    %v926 = vpack.c.b16 %v915, %v914
    %v927 = vpack.c.b16 %v917, %v916
    %v928 = vpack.c.b16 %v919, %v918
    %v929 = vpack.c.b16 %v921, %v920
    %938 = vmatprep.subr.bf16.mxu0 0
    %939 = vmatpush1.bf16.msra.mxu0 %v922
    %940 = vmatprep.subr.bf16.mxu0 0
    %941 = vmatpush1.bf16.msra.mxu0 %v923
    %942 = vmatprep.subr.bf16.mxu0 0
    %943 = vmatpush1.bf16.msra.mxu0 %v924
    %944 = vmatprep.subr.bf16.mxu0 0
    %945 = vmatpush1.bf16.msra.mxu0 %v925
    %946 = vmatprep.subr.bf16.mxu0 0
    %947 = vmatpush1.bf16.msra.mxu0 %v926
    %948 = vmatprep.subr.bf16.mxu0 0
    %949 = vmatpush1.bf16.msra.mxu0 %v927
    %950 = vmatprep.subr.bf16.mxu0 0
    %951 = vmatpush1.bf16.msra.mxu0 %v928
    %952 = vmatprep.subr.bf16.mxu0 0
    %953 = vmatpush1.bf16.msra.mxu0 %v929
    %954 = vmatprep.subr.bf16.mxu0 0
    %955 = vmatpush1.bf16.msra.mxu0 0
    %956 = vmatprep.subr.bf16.mxu0 0
    %957 = vmatpush1.bf16.msra.mxu0 0
    %958 = vmatprep.subr.bf16.mxu0 0
    %959 = vmatpush1.bf16.msra.mxu0 0
    %960 = vmatprep.subr.bf16.mxu0 0
    %961 = vmatpush1.bf16.msra.mxu0 0
    %962 = vmatprep.subr.bf16.mxu0 0
    %963 = vmatpush1.bf16.msra.mxu0 0
    %964 = vmatprep.subr.bf16.mxu0 0
    %965 = vmatpush1.bf16.msra.mxu0 0
    %966 = vmatprep.subr.bf16.mxu0 0
    %967 = vmatpush1.bf16.msra.mxu0 0
    %968 = vmatprep.subr.bf16.mxu0 0
    %969 = vmatpush1.bf16.msra.mxu0 0
    %970 = vmatprep.mubr.bf16.mxu0 0
    %971 = vmatmul.mubr.bf16.gmra.mrb[0].mxu0 %v853
    %v972 = vpop.f32.mrb[0].mxu0
    %v973 = vadd.f32 0.0, %v972
    %v974 = vpop.f32.mrb[0].mxu0
    %v975 = vpop.f32.mrb[0].mxu0
    %v976 = vadd.f32 0.0, %v975
    %v977 = vpop.f32.mrb[0].mxu0
    %978 = vmatprep.mubr.bf16.mxu0 0
    %979 = vmatmul.mubr.bf16.gmra.mrb[0].mxu0 %v870
    %v980 = vpop.f32.mrb[0].mxu0
    %v981 = vadd.f32 0.0, %v980
    %v982 = vpop.f32.mrb[0].mxu0
    %v983 = vpop.f32.mrb[0].mxu0
    %v984 = vadd.f32 0.0, %v983
    %v985 = vpop.f32.mrb[0].mxu0
    %986 = vdwg.mxu0
    %v987 = vadd.f32 %v821, %v973
    %v988 = vadd.f32 %v824, %v976
    %v989 = vadd.f32 %v829, %v981
    %v990 = vadd.f32 %v832, %v984
    %v991 = vld [vmem:[%s4] sm:$0x1]
    %v993 = vlaneseq
    %v994 = vshrl.u32 %v993, 7
    %v995 = vsub.s32 0, %v994
    %v996 = vrot.slane %v991, %v995
    %v998 = vadd.f32 %v987, %v996
    %v999 = vadd.f32 %v988, %v996
    %v1000 = vadd.f32 %v989, %v996
    %v1001 = vadd.f32 %v990, %v996
    %v1002 = vadd.f32 %v998, %v71
    %v1003 = vadd.f32 %v999, %v72
    %v1004 = vadd.f32 %v1000, %v73
    %v1005 = vadd.f32 %v1001, %v74
    %v1006 = vmax.f32 %v1002, 0.0
    %v1007 = vmax.f32 %v1003, 0.0
    %v1008 = vmax.f32 %v1004, 0.0
    %v1009 = vmax.f32 %v1005, 0.0
    %1010 = vst [vmem:[#allocation9] sm:$0xff] %v1006
    %1011 = vst [vmem:[#allocation9 + $0x8] sm:$0xff] %v1007
    %1012 = vst [vmem:[#allocation9 + $0x10] sm:$0xff] %v1008
    %1013 = vst [vmem:[#allocation9 + $0x18] sm:$0xff] %v1009
    // Predicated region
    $region38: #{tpu_custom_call.1} parent=1 // pred_check
      _
    $region39: #{tpu_custom_call.1} parent=1 // pred_check_branch
      %1015 = sbr.rel (0) target = $region41
    $region40: #{tpu_custom_call.1} parent=1 // pred_region
      %s1017 = ssub.s32 512, 512
      %1018 = vsyncadd [#allocation5], %s1017
      %s1019 = sshll.u32 [#allocation9], 4
      %s1020 = int_to_ptr.vmem [resolvable:$true] %s1019
      %1025 = dma.vmem_to_hbm [thread:$0]  %s1020, 512, %s5, [#allocation5], 128, 128, 8
    $region41: #{tpu_custom_call.1} parent=1 // pred_fallthru
      _
    // Predicated region
    $region42: #{tpu_custom_call.1} parent=1 // pred_check
      _
    $region43: #{tpu_custom_call.1} parent=1 // pred_check_branch
      %1027 = sbr.rel (0) target = $region45
    $region44: #{tpu_custom_call.1} parent=1 // pred_region
      %1028 = dma.done [#allocation5], 512
    $region45: #{tpu_custom_call.1} parent=1 // pred_fallthru
      _
    %1029 = vsyncpa [#allocation4], 1
    %1030 = vsyncpa [#allocation7], 1
    %1031 = vsyncpa [#allocation5], 1

</llo_original>
